<compile_context>
chip_gen: v7x
topology: tpu7x:2x2x1
jax: 0.10.0
libtpu: 0.0.40
codegen_flags: <defaults>
</compile_context>

<pallas_src>
import jax
import jax.numpy as jnp
from jax.experimental import pallas as pl
from jax.experimental.pallas import tpu as pltpu

NEG_SLOPE = 0.2
H1, H2, OUT = 512, 256, 3
LANE = 128       # vreg lane width
SUBLANE = 8      # vreg sublane count (fp32)


def _leaky_relu(x):
    return jnp.where(x > 0, x, NEG_SLOPE * x)


def _round_up(n, m):
    return ((n + m - 1) // m) * m


def classifier_kernel(x_ref, w1_ref, b1_ref, w2_ref, b2_ref, w3_ref, b3_ref,
                      o_ref):
    """One batch tile: (TILE_B, in_dim) f32 -> (TILE_B, OUT_pad) f32.

    Matmul operands are bf16 (weights arrive as bf16, activations are cast
    in-kernel); accumulation is f32 via preferred_element_type.
    """
    x = x_ref[...].astype(jnp.bfloat16)
    h1 = _leaky_relu(
        jnp.dot(x, w1_ref[...], preferred_element_type=jnp.float32)
        + b1_ref[...])                                        # (TILE_B, 512) f32
    h2 = _leaky_relu(
        jnp.dot(h1.astype(jnp.bfloat16), w2_ref[...],
                preferred_element_type=jnp.float32)
        + b2_ref[...])                                        # (TILE_B, 256) f32
    h3 = _leaky_relu(
        jnp.dot(h2.astype(jnp.bfloat16), w3_ref[...],
                preferred_element_type=jnp.float32)
        + b3_ref[...])                                        # (TILE_B, 128) f32
    o_ref[...] = h3


def classifier_forward(x, params, *, tile_b=2048):
    """x: (batch, input_size) fp32. params: dict of w1,b1,w2,b2,w3,b3 (fp32)."""
    w1, b1 = params["w1"], params["b1"]
    w2, b2 = params["w2"], params["b2"]
    w3, b3 = params["w3"], params["b3"]

    batch, in_dim = x.shape
    out_pad = LANE   # lane-dense output stores; real 3 columns sliced off below

    # Weights shipped as bf16 (one-time cast of ~0.4 MB of parameters).
    # W3/b3 are zero-padded to 128 output columns: padded columns produce
    # leaky_relu(0) = 0 and are sliced off after the call.
    w1b = w1.astype(jnp.bfloat16)                               # (in_dim, 512)
    w2b = w2.astype(jnp.bfloat16)                               # (512, 256)
    w3b = jnp.zeros((H2, out_pad), jnp.bfloat16).at[:, :OUT].set(
        w3.astype(jnp.bfloat16))                                # (256, 128)
    b3p = jnp.zeros((1, out_pad), jnp.float32).at[:, :OUT].set(b3)

    # Batch tile: as large as tile_b, but capped so that batches > 8 always
    # produce at least two grid steps (v7x megacore: both TensorCores busy).
    tb_cap = max(SUBLANE, _round_up(pl.cdiv(batch, 2), SUBLANE))
    tb = min(tile_b, tb_cap)
    n_tiles = pl.cdiv(batch, tb)

    flops = 2 * batch * (in_dim * H1 + H1 * H2 + H2 * out_pad)
    bytes_accessed = (4 * x.size                                  # x (f32)
                      + 2 * (w1b.size + w2b.size + w3b.size)      # weights bf16
                      + 4 * (b1.size + b2.size + b3p.size)        # biases f32
                      + 4 * batch * out_pad)                      # output f32

    out_padded = pl.pallas_call(
        classifier_kernel,
        out_shape=jax.ShapeDtypeStruct((batch, out_pad), jnp.float32),
        grid=(n_tiles,),
        in_specs=[
            # Only x is tiled along the batch grid axis; last dim equals the
            # full array dim so the (8,128) divisibility rule is satisfied.
            pl.BlockSpec((tb, in_dim), lambda i: (i, 0)),
            # Weights / biases: constant index_map -> DMA'd once, VMEM-resident.
            pl.BlockSpec((in_dim, H1), lambda i: (0, 0)),
            pl.BlockSpec((1, H1), lambda i: (0, 0)),
            pl.BlockSpec((H1, H2), lambda i: (0, 0)),
            pl.BlockSpec((1, H2), lambda i: (0, 0)),
            pl.BlockSpec((H2, out_pad), lambda i: (0, 0)),
            pl.BlockSpec((1, out_pad), lambda i: (0, 0)),
        ],
        out_specs=pl.BlockSpec((tb, out_pad), lambda i: (i, 0)),
        compiler_params=pltpu.CompilerParams(
            dimension_semantics=("parallel",),      # megacore split on v7x
            vmem_limit_bytes=32 * 1024 * 1024,      # safe on v5e/v6e/v7x
        ),
        cost_estimate=pl.CostEstimate(
            flops=flops, transcendentals=0, bytes_accessed=bytes_accessed),
    )(x, w1b, b1, w2, b2, w3b, b3p)

    return out_padded[:, :OUT]


def init_params(key, input_size):
    """Deterministic synthetic init (shapes match the nn.Linear layers)."""
    ks = jax.random.split(key, 6)

    def lin(kw, kb, fan_in, fan_out):
        bound = 1.0 / jnp.sqrt(fan_in)
        w = jax.random.uniform(kw, (fan_in, fan_out), jnp.float32, -bound, bound)
        b = jax.random.uniform(kb, (1, fan_out), jnp.float32, -bound, bound)
        return w, b

    w1, b1 = lin(ks[0], ks[1], input_size, H1)
    w2, b2 = lin(ks[2], ks[3], H1, H2)
    w3, b3 = lin(ks[4], ks[5], H2, OUT)
    return {"w1": w1, "b1": b1, "w2": w2, "b2": b2, "w3": w3, "b3": b3}


def reference_forward(x, p):
    def lrelu(y):
        return jnp.where(y > 0, y, NEG_SLOPE * y)
    h = lrelu(x @ p["w1"] + p["b1"])
    h = lrelu(h @ p["w2"] + p["b2"])
    h = lrelu(h @ p["w3"] + p["b3"])
    return h


if __name__ == "__main__":
    key = jax.random.PRNGKey(0)
    k_x, k_p = jax.random.split(key)

    # In the original script: input_size = x.shape[1] - 3.
    # Emulate a data row of width 32 -> classifier input_size = 29.
    batch = 8
    raw_width = 32
    input_size = raw_width - 3

    x = jax.random.normal(k_x, (batch, input_size), jnp.float32)
    params = init_params(k_p, input_size)

    out = classifier_forward(x, params)
    out = jax.block_until_ready(out)

    ref = reference_forward(x, params)   # fp32 reference
    assert out.shape == (batch, OUT), out.shape
    # bf16 matmul operands with f32 accumulation -> small drift vs fp32 ref.
    assert jnp.allclose(out, ref, atol=5e-2, rtol=5e-2), "mismatch vs reference"

    print("KERNEL_OK")
</pallas_src>

<mosaic_0001>
module attributes {stable_mosaic.version = 11 : i64} {
  func.func @classifier_kernel(%arg0: i32, %arg1: memref<8x29xf32, #tpu.memory_space<vmem>>, %arg2: memref<29x512xbf16, #tpu.memory_space<vmem>>, %arg3: memref<1x512xf32, #tpu.memory_space<vmem>>, %arg4: memref<512x256xf32, #tpu.memory_space<vmem>>, %arg5: memref<1x256xf32, #tpu.memory_space<vmem>>, %arg6: memref<256x128xbf16, #tpu.memory_space<vmem>>, %arg7: memref<1x128xf32, #tpu.memory_space<vmem>>, %arg8: memref<8x128xf32, #tpu.memory_space<vmem>>) attributes {dimension_semantics = [#tpu.dimension_semantics<parallel>], iteration_bounds = array<i64: 1>, scalar_prefetch = 0 : i64, scratch_operands = 0 : i64, tpu.core_type = #tpu.core_type<tc>, window_params = [{transform_indices = @transform_0, window_bounds = array<i64: 8, 29>}, {pipeline_mode = #tpu.pipeline_mode<synchronous>, transform_indices = @transform_1, window_bounds = array<i64: 29, 512>}, {pipeline_mode = #tpu.pipeline_mode<synchronous>, transform_indices = @transform_2, window_bounds = array<i64: 1, 512>}, {pipeline_mode = #tpu.pipeline_mode<synchronous>, transform_indices = @transform_3, window_bounds = array<i64: 512, 256>}, {pipeline_mode = #tpu.pipeline_mode<synchronous>, transform_indices = @transform_4, window_bounds = array<i64: 1, 256>}, {pipeline_mode = #tpu.pipeline_mode<synchronous>, transform_indices = @transform_5, window_bounds = array<i64: 256, 128>}, {pipeline_mode = #tpu.pipeline_mode<synchronous>, transform_indices = @transform_6, window_bounds = array<i64: 1, 128>}, {transform_indices = @transform_7, window_bounds = array<i64: 8, 128>}]} {
    %c0 = arith.constant 0 : index
    %c0_0 = arith.constant 0 : index
    %0 = vector.load %arg1[%c0, %c0_0] : memref<8x29xf32, #tpu.memory_space<vmem>>, vector<8x29xf32>
    %1 = arith.truncf %0 : vector<8x29xf32> to vector<8x29xbf16>
    %c0_1 = arith.constant 0 : index
    %c0_2 = arith.constant 0 : index
    %2 = vector.load %arg2[%c0_1, %c0_2] : memref<29x512xbf16, #tpu.memory_space<vmem>>, vector<29x512xbf16>
    %cst = arith.constant dense<0.000000e+00> : vector<8x512xf32>
    %3 = tpu.matmul %1, %2, %cst {dimension_numbers = #tpu.dot_dimension_numbers<[1], [0], [0], [1], [0, 0, 1, 1], [], []>} : vector<8x29xbf16>, vector<29x512xbf16>, vector<8x512xf32> -> vector<8x512xf32>
    %c0_3 = arith.constant 0 : index
    %c0_4 = arith.constant 0 : index
    %4 = vector.load %arg3[%c0_3, %c0_4] : memref<1x512xf32, #tpu.memory_space<vmem>>, vector<1x512xf32>
    %5 = vector.broadcast %4 : vector<1x512xf32> to vector<8x512xf32>
    %6 = arith.addf %3, %5 : vector<8x512xf32>
    %cst_5 = arith.constant 0.000000e+00 : f32
    %7 = vector.broadcast %cst_5 : f32 to vector<8x512xf32>
    %8 = arith.cmpf ogt, %6, %7 : vector<8x512xf32>
    %cst_6 = arith.constant 2.000000e-01 : f32
    %9 = vector.broadcast %cst_6 : f32 to vector<8x512xf32>
    %10 = arith.mulf %9, %6 : vector<8x512xf32>
    %11 = arith.select %8, %6, %10 : vector<8x512xi1>, vector<8x512xf32>
    %12 = arith.truncf %11 : vector<8x512xf32> to vector<8x512xbf16>
    %c0_7 = arith.constant 0 : index
    %c0_8 = arith.constant 0 : index
    %13 = vector.load %arg4[%c0_7, %c0_8] : memref<512x256xf32, #tpu.memory_space<vmem>>, vector<512x256xf32>
    %cst_9 = arith.constant dense<0.000000e+00> : vector<8x256xf32>
    %14 = tpu.matmul %12, %13, %cst_9 {dimension_numbers = #tpu.dot_dimension_numbers<[1], [0], [0], [1], [0, 0, 1, 1], [], []>} : vector<8x512xbf16>, vector<512x256xf32>, vector<8x256xf32> -> vector<8x256xf32>
    %c0_10 = arith.constant 0 : index
    %c0_11 = arith.constant 0 : index
    %15 = vector.load %arg5[%c0_10, %c0_11] : memref<1x256xf32, #tpu.memory_space<vmem>>, vector<1x256xf32>
    %16 = vector.broadcast %15 : vector<1x256xf32> to vector<8x256xf32>
    %17 = arith.addf %14, %16 : vector<8x256xf32>
    %cst_12 = arith.constant 0.000000e+00 : f32
    %18 = vector.broadcast %cst_12 : f32 to vector<8x256xf32>
    %19 = arith.cmpf ogt, %17, %18 : vector<8x256xf32>
    %cst_13 = arith.constant 2.000000e-01 : f32
    %20 = vector.broadcast %cst_13 : f32 to vector<8x256xf32>
    %21 = arith.mulf %20, %17 : vector<8x256xf32>
    %22 = arith.select %19, %17, %21 : vector<8x256xi1>, vector<8x256xf32>
    %23 = arith.truncf %22 : vector<8x256xf32> to vector<8x256xbf16>
    %c0_14 = arith.constant 0 : index
    %c0_15 = arith.constant 0 : index
    %24 = vector.load %arg6[%c0_14, %c0_15] : memref<256x128xbf16, #tpu.memory_space<vmem>>, vector<256x128xbf16>
    %cst_16 = arith.constant dense<0.000000e+00> : vector<8x128xf32>
    %25 = tpu.matmul %23, %24, %cst_16 {dimension_numbers = #tpu.dot_dimension_numbers<[1], [0], [0], [1], [0, 0, 1, 1], [], []>} : vector<8x256xbf16>, vector<256x128xbf16>, vector<8x128xf32> -> vector<8x128xf32>
    %c0_17 = arith.constant 0 : index
    %c0_18 = arith.constant 0 : index
    %26 = vector.load %arg7[%c0_17, %c0_18] : memref<1x128xf32, #tpu.memory_space<vmem>>, vector<1x128xf32>
    %27 = vector.broadcast %26 : vector<1x128xf32> to vector<8x128xf32>
    %28 = arith.addf %25, %27 : vector<8x128xf32>
    %cst_19 = arith.constant 0.000000e+00 : f32
    %29 = vector.broadcast %cst_19 : f32 to vector<8x128xf32>
    %30 = arith.cmpf ogt, %28, %29 : vector<8x128xf32>
    %cst_20 = arith.constant 2.000000e-01 : f32
    %31 = vector.broadcast %cst_20 : f32 to vector<8x128xf32>
    %32 = arith.mulf %31, %28 : vector<8x128xf32>
    %33 = arith.select %30, %28, %32 : vector<8x128xi1>, vector<8x128xf32>
    %c0_21 = arith.constant 0 : index
    %c0_22 = arith.constant 0 : index
    %34 = vector.load %arg8[%c0_21, %c0_22] : memref<8x128xf32, #tpu.memory_space<vmem>>, vector<8x128xf32>
    tpu.vector_store %arg8[%c0_21, %c0_22], %33 {strides = array<i32>} : memref<8x128xf32, #tpu.memory_space<vmem>>, vector<8x128xf32>,
    return
  }
  func.func @transform_0(%arg0: i32) -> (i32, i32) {
    %c0_i32 = arith.constant 0 : i32
    %c0_i32_0 = arith.constant 0 : i32
    return %arg0, %c0_i32 : i32, i32
  }
  func.func @transform_1(%arg0: i32) -> (i32, i32) {
    %c0_i32 = arith.constant 0 : i32
    %c0_i32_0 = arith.constant 0 : i32
    %c0_i32_1 = arith.constant 0 : i32
    return %c0_i32, %c0_i32_0 : i32, i32
  }
  func.func @transform_2(%arg0: i32) -> (i32, i32) {
    %c0_i32 = arith.constant 0 : i32
    %c0_i32_0 = arith.constant 0 : i32
    %c0_i32_1 = arith.constant 0 : i32
    return %c0_i32, %c0_i32_0 : i32, i32
  }
  func.func @transform_3(%arg0: i32) -> (i32, i32) {
    %c0_i32 = arith.constant 0 : i32
    %c0_i32_0 = arith.constant 0 : i32
    %c0_i32_1 = arith.constant 0 : i32
    return %c0_i32, %c0_i32_0 : i32, i32
  }
  func.func @transform_4(%arg0: i32) -> (i32, i32) {
    %c0_i32 = arith.constant 0 : i32
    %c0_i32_0 = arith.constant 0 : i32
    %c0_i32_1 = arith.constant 0 : i32
    return %c0_i32, %c0_i32_0 : i32, i32
  }
  func.func @transform_5(%arg0: i32) -> (i32, i32) {
    %c0_i32 = arith.constant 0 : i32
    %c0_i32_0 = arith.constant 0 : i32
    %c0_i32_1 = arith.constant 0 : i32
    return %c0_i32, %c0_i32_0 : i32, i32
  }
  func.func @transform_6(%arg0: i32) -> (i32, i32) {
    %c0_i32 = arith.constant 0 : i32
    %c0_i32_0 = arith.constant 0 : i32
    %c0_i32_1 = arith.constant 0 : i32
    return %c0_i32, %c0_i32_0 : i32, i32
  }
  func.func @transform_7(%arg0: i32) -> (i32, i32) {
    %c0_i32 = arith.constant 0 : i32
    %c0_i32_0 = arith.constant 0 : i32
    return %arg0, %c0_i32 : i32, i32
  }
}

</mosaic_0001>

<llo_original>
// kernel: tpu_custom_call.1
$region0: #{tpu_custom_call.1}
  #allocation0 [shape = 'u32[]', space=smem, size = 0x4, offset = 0x4, fixed_abs, tag = 'smem constant byte address 0x4 - core index']
  #allocation1 [shape = 'u32[144,128]{1,0:T(1,128)}', space=vmem, size = 0x12000, scoped, tag = 'internal scratch']
  %s0 = inlined_call_operand.hbm [shape: f32[8,29], index: 0, kind: input, shape index: {}]
  %s1 = inlined_call_operand.hbm [shape: bf16[29,512], index: 1, kind: input, shape index: {}]
  %s2 = inlined_call_operand.vmem [shape: f32[1,512], index: 2, kind: input, shape index: {}]
  %s3 = inlined_call_operand.hbm [shape: f32[512,256], index: 3, kind: input, shape index: {}]
  %s4 = inlined_call_operand.vmem [shape: f32[1,256], index: 4, kind: input, shape index: {}]
  %s5 = inlined_call_operand.hbm [shape: bf16[256,128], index: 5, kind: input, shape index: {}]
  %s6 = inlined_call_operand.vmem [shape: f32[1,128], index: 6, kind: input, shape index: {}]
  %s7 = inlined_call_operand.hbm [shape: f32[8,128], index: 7, kind: output, shape index: {}]
  %s8 = sld [smem:[#allocation0]]
  $region54: #{tpu_custom_call.1} parent=0
    _
  %s10 = ssub.s32 1, %s8
  %s11 = scalar_select 0, %s10, %s8
  $region1: #{tpu_custom_call.1} parent=0
    #allocation2 [shape = 'u8[4096]{0}', space=vmem, size = 0x1000, scoped, tag = 'input window, operand 0, single buffered']
    #allocation3 [shape = 's32[1]{0}', space=sflag, size = 0x4, scoped, tag = 'scoped memory for tpu_custom_call.1']
    #allocation4 [shape = 's32[1]{0}', space=sflag, size = 0x4, scoped, tag = 'scoped memory for tpu_custom_call.1']
    #allocation5 [shape = 'u8[32768]{0}', space=vmem, size = 0x8000, scoped, tag = 'input window, operand 1, single buffered']
    #allocation6 [shape = 's32[1]{0}', space=sflag, size = 0x4, scoped, tag = 'scoped memory for tpu_custom_call.1']
    #allocation7 [shape = 'u8[524288]{0}', space=vmem, size = 0x80000, scoped, tag = 'input window, operand 3, single buffered']
    #allocation8 [shape = 'u8[65536]{0}', space=vmem, size = 0x10000, scoped, tag = 'input window, operand 5, single buffered']
    #allocation9 [shape = 's32[1]{0}', space=sflag, size = 0x4, scoped, tag = 'scoped memory for tpu_custom_call.1']
    #allocation10 [shape = 'u8[4096]{0}', space=vmem, size = 0x1000, scoped, tag = 'output window, operand 0, single buffered']
    %12 = vsyncpa [#allocation3], 0
    %13 = vsyncpa [#allocation6], 0
    %14 = vsyncpa [#allocation9], 0
    %15 = vsyncpa [#allocation4], 0
    // Predicated region
    $region2: #{tpu_custom_call.1} parent=1 // pred_check
      _
    $region3: #{tpu_custom_call.1} parent=1 // pred_check_branch
      %17 = sbr.rel (0) target = $region5
    $region4: #{tpu_custom_call.1} parent=1 // pred_region
      %s19 = ssub.s32 128, 128
      %20 = vsyncadd [#allocation3], %s19
      %s22 = sshll.u32 [#allocation2], 4
      %s23 = int_to_ptr.vmem [resolvable:$true] %s22
      %25 = dma.hbm_to_vmem [thread:$0]  %s0, 128, %s23, [#allocation3]
    $region5: #{tpu_custom_call.1} parent=1 // pred_fallthru
      _
    // Predicated region
    $region6: #{tpu_custom_call.1} parent=1 // pred_check
      _
    $region7: #{tpu_custom_call.1} parent=1 // pred_check_branch
      %27 = sbr.rel (0) target = $region9
    $region8: #{tpu_custom_call.1} parent=1 // pred_region
      %s29 = ssub.s32 1024, 1024
      %30 = vsyncadd [#allocation6], %s29
      %s31 = sshll.u32 [#allocation5], 4
      %s32 = int_to_ptr.vmem [resolvable:$true] %s31
      %37 = dma.hbm_to_vmem [thread:$0]  %s1, 1024, %s32, [#allocation6], 256, 256, 16
    $region9: #{tpu_custom_call.1} parent=1 // pred_fallthru
      _
    // Predicated region
    $region10: #{tpu_custom_call.1} parent=1 // pred_check
      _
    $region11: #{tpu_custom_call.1} parent=1 // pred_check_branch
      %39 = sbr.rel (0) target = $region13
    $region12: #{tpu_custom_call.1} parent=1 // pred_region
      _
    $region13: #{tpu_custom_call.1} parent=1 // pred_fallthru
      _
    // Predicated region
    $region14: #{tpu_custom_call.1} parent=1 // pred_check
      _
    $region15: #{tpu_custom_call.1} parent=1 // pred_check_branch
      %41 = sbr.rel (0) target = $region17
    $region16: #{tpu_custom_call.1} parent=1 // pred_region
      %s43 = ssub.s32 16384, 16384
      %44 = vsyncadd [#allocation6], %s43
      %s45 = sshll.u32 [#allocation7], 4
      %s46 = int_to_ptr.vmem [resolvable:$true] %s45
      %51 = dma.hbm_to_vmem [thread:$0]  %s3, 16384, %s46, [#allocation6], 256, 256, 16
    $region17: #{tpu_custom_call.1} parent=1 // pred_fallthru
      _
    // Predicated region
    $region18: #{tpu_custom_call.1} parent=1 // pred_check
      _
    $region19: #{tpu_custom_call.1} parent=1 // pred_check_branch
      %53 = sbr.rel (0) target = $region21
    $region20: #{tpu_custom_call.1} parent=1 // pred_region
      _
    $region21: #{tpu_custom_call.1} parent=1 // pred_fallthru
      _
    // Predicated region
    $region22: #{tpu_custom_call.1} parent=1 // pred_check
      _
    $region23: #{tpu_custom_call.1} parent=1 // pred_check_branch
      %55 = sbr.rel (0) target = $region25
    $region24: #{tpu_custom_call.1} parent=1 // pred_region
      %s57 = ssub.s32 2048, 2048
      %58 = vsyncadd [#allocation9], %s57
      %s59 = sshll.u32 [#allocation8], 4
      %s60 = int_to_ptr.vmem [resolvable:$true] %s59
      %65 = dma.hbm_to_vmem [thread:$0]  %s5, 2048, %s60, [#allocation9], 64, 64, 4
    $region25: #{tpu_custom_call.1} parent=1 // pred_fallthru
      _
    // Predicated region
    $region26: #{tpu_custom_call.1} parent=1 // pred_check
      _
    $region27: #{tpu_custom_call.1} parent=1 // pred_check_branch
      %67 = sbr.rel (0) target = $region29
    $region28: #{tpu_custom_call.1} parent=1 // pred_region
      _
    $region29: #{tpu_custom_call.1} parent=1 // pred_fallthru
      _
    // Predicated region
    $region30: #{tpu_custom_call.1} parent=1 // pred_check
      _
    $region31: #{tpu_custom_call.1} parent=1 // pred_check_branch
      %69 = sbr.rel (0) target = $region33
    $region32: #{tpu_custom_call.1} parent=1 // pred_region
      %70 = dma.done [#allocation3], 128
    $region33: #{tpu_custom_call.1} parent=1 // pred_fallthru
      _
    // Predicated region
    $region34: #{tpu_custom_call.1} parent=1 // pred_check
      _
    $region35: #{tpu_custom_call.1} parent=1 // pred_check_branch
      %72 = sbr.rel (0) target = $region37
    $region36: #{tpu_custom_call.1} parent=1 // pred_region
      %73 = dma.done [#allocation6], 1024
    $region37: #{tpu_custom_call.1} parent=1 // pred_fallthru
      _
    // Predicated region
    $region38: #{tpu_custom_call.1} parent=1 // pred_check
      _
    $region39: #{tpu_custom_call.1} parent=1 // pred_check_branch
      %75 = sbr.rel (0) target = $region41
    $region40: #{tpu_custom_call.1} parent=1 // pred_region
      %76 = dma.done [#allocation6], 16384
    $region41: #{tpu_custom_call.1} parent=1 // pred_fallthru
      _
    // Predicated region
    $region42: #{tpu_custom_call.1} parent=1 // pred_check
      _
    $region43: #{tpu_custom_call.1} parent=1 // pred_check_branch
      %78 = sbr.rel (0) target = $region45
    $region44: #{tpu_custom_call.1} parent=1 // pred_region
      %79 = dma.done [#allocation9], 2048
    $region45: #{tpu_custom_call.1} parent=1 // pred_fallthru
      _
    %v81 = vld [vmem:[#allocation2] sm:$0xff]
    %v82 = vpack.c.bf16 %v81, %v81
    %v83 = vld [vmem:[#allocation5] sm:$0xff]
    %v84 = vld [vmem:[#allocation5 + $0x8] sm:$0xff]
    %v85 = vld [vmem:[#allocation5 + $0x10] sm:$0xff]
    %v86 = vld [vmem:[#allocation5 + $0x18] sm:$0xff]
    %v87 = vld [vmem:[#allocation5 + $0x20] sm:$0xff]
    %v88 = vld [vmem:[#allocation5 + $0x28] sm:$0xff]
    %v89 = vld [vmem:[#allocation5 + $0x30] sm:$0x77]
    %v90 = vld [vmem:[#allocation5 + $0x38] sm:$0x77]
    %v91 = vld [vmem:[%s2] sm:$0xf]
    %v93 = vlaneseq
    %v94 = vshrl.u32 %v93, 7
    %v95 = vsub.s32 0, %v94
    %v96 = vrot.slane %v91, %v95
    %v97 = vlaneseq
    %v98 = vshrl.u32 %v97, 7
    %v99 = vsub.s32 1, %v98
    %v100 = vrot.slane %v91, %v99
    %v101 = vlaneseq
    %v102 = vshrl.u32 %v101, 7
    %v103 = vsub.s32 2, %v102
    %v104 = vrot.slane %v91, %v103
    %v105 = vlaneseq
    %v106 = vshrl.u32 %v105, 7
    %v107 = vsub.s32 3, %v106
    %v108 = vrot.slane %v91, %v107
    %v121 = vunpack.c.l.b16 %v83
    %v122 = vunpack.c.h.b16 %v83
    %v123 = vunpack.c.l.b16 %v84
    %v124 = vunpack.c.h.b16 %v84
    %v125 = vunpack.c.l.b16 %v85
    %v126 = vunpack.c.h.b16 %v85
    %v127 = vunpack.c.l.b16 %v86
    %v128 = vunpack.c.h.b16 %v86
    %v129 = vunpack.c.l.b16 %v87
    %v130 = vunpack.c.h.b16 %v87
    %v131 = vunpack.c.l.b16 %v88
    %v132 = vunpack.c.h.b16 %v88
    %v133 = vunpack.c.l.b16 %v89
    %v134 = vunpack.c.h.b16 %v89
    %v135 = vunpack.c.l.b16 %v90
    %v136 = vunpack.c.h.b16 %v90
    %v137 = vpack.c.b16 %v125, %v121
    %v138 = vpack.c.b16 %v126, %v122
    %v139 = vpack.c.b16 %v127, %v123
    %v140 = vpack.c.b16 %v128, %v124
    %v141 = vpack.c.b16 %v133, %v129
    %v142 = vpack.c.b16 %v134, %v130
    %v143 = vpack.c.b16 %v135, %v131
    %v144 = vpack.c.b16 %v136, %v132
    %vm149 = vcmask 236544
    %v151 = vsel %vm149, %v82, 0
    %vm153 = vcmask 1045504
    %vm154 = vcmask 1046528
    %v155 = vsel %vm153, 4294967295, 65535
    %v156 = vsel %vm154, %v155, 0
    %v158 = vand.u32 %v141, %v156
    %v161 = vand.u32 %v142, %v156
    %v164 = vand.u32 %v143, %v156
    %v167 = vand.u32 %v144, %v156
    %169 = vmatprep.subr.bf16.mxu0 %v138
    %170 = vmatpush1.bf16.msra.mxu0 %v137
    %171 = vmatprep.subr.bf16.mxu0 %v161
    %172 = vmatpush1.bf16.msra.mxu0 %v158
    %173 = vmatprep.subr.bf16.mxu0 0
    %174 = vmatpush1.bf16.msra.mxu0 0
    %175 = vmatprep.subr.bf16.mxu0 0
    %176 = vmatpush1.bf16.msra.mxu0 0
    %177 = vmatprep.subr.bf16.mxu0 0
    %178 = vmatpush1.bf16.msra.mxu0 0
    %179 = vmatprep.subr.bf16.mxu0 0
    %180 = vmatpush1.bf16.msra.mxu0 0
    %181 = vmatprep.subr.bf16.mxu0 0
    %182 = vmatpush1.bf16.msra.mxu0 0
    %183 = vmatprep.subr.bf16.mxu0 0
    %184 = vmatpush1.bf16.msra.mxu0 0
    %185 = vmatprep.subr.bf16.mxu0 0
    %186 = vmatpush1.bf16.msra.mxu0 0
    %187 = vmatprep.subr.bf16.mxu0 0
    %188 = vmatpush1.bf16.msra.mxu0 0
    %189 = vmatprep.subr.bf16.mxu0 0
    %190 = vmatpush1.bf16.msra.mxu0 0
    %191 = vmatprep.subr.bf16.mxu0 0
    %192 = vmatpush1.bf16.msra.mxu0 0
    %193 = vmatprep.subr.bf16.mxu0 0
    %194 = vmatpush1.bf16.msra.mxu0 0
    %195 = vmatprep.subr.bf16.mxu0 0
    %196 = vmatpush1.bf16.msra.mxu0 0
    %197 = vmatprep.subr.bf16.mxu0 0
    %198 = vmatpush1.bf16.msra.mxu0 0
    %199 = vmatprep.subr.bf16.mxu0 0
    %200 = vmatpush1.bf16.msra.mxu0 0
    %201 = vmatprep.mubr.bf16.mxu0 0
    %202 = vmatmul.mubr.bf16.gmra.mrb[0].mxu0 %v151
    %v203 = vpop.f32.mrb[0].mxu0
    %v204 = vadd.f32 %v96, %v203
    %v205 = vpop.f32.mrb[0].mxu0
    %v206 = vadd.f32 %v100, %v205
    %v207 = vpop.f32.mrb[0].mxu0
    %v208 = vpop.f32.mrb[0].mxu0
    %209 = vdwg.mxu0
    %210 = vmatprep.subr.bf16.mxu0 %v140
    %211 = vmatpush1.bf16.msra.mxu0 %v139
    %212 = vmatprep.subr.bf16.mxu0 %v167
    %213 = vmatpush1.bf16.msra.mxu0 %v164
    %214 = vmatprep.subr.bf16.mxu0 0
    %215 = vmatpush1.bf16.msra.mxu0 0
    %216 = vmatprep.subr.bf16.mxu0 0
    %217 = vmatpush1.bf16.msra.mxu0 0
    %218 = vmatprep.subr.bf16.mxu0 0
    %219 = vmatpush1.bf16.msra.mxu0 0
    %220 = vmatprep.subr.bf16.mxu0 0
    %221 = vmatpush1.bf16.msra.mxu0 0
    %222 = vmatprep.subr.bf16.mxu0 0
    %223 = vmatpush1.bf16.msra.mxu0 0
    %224 = vmatprep.subr.bf16.mxu0 0
    %225 = vmatpush1.bf16.msra.mxu0 0
    %226 = vmatprep.subr.bf16.mxu0 0
    %227 = vmatpush1.bf16.msra.mxu0 0
    %228 = vmatprep.subr.bf16.mxu0 0
    %229 = vmatpush1.bf16.msra.mxu0 0
    %230 = vmatprep.subr.bf16.mxu0 0
    %231 = vmatpush1.bf16.msra.mxu0 0
    %232 = vmatprep.subr.bf16.mxu0 0
    %233 = vmatpush1.bf16.msra.mxu0 0
    %234 = vmatprep.subr.bf16.mxu0 0
    %235 = vmatpush1.bf16.msra.mxu0 0
    %236 = vmatprep.subr.bf16.mxu0 0
    %237 = vmatpush1.bf16.msra.mxu0 0
    %238 = vmatprep.subr.bf16.mxu0 0
    %239 = vmatpush1.bf16.msra.mxu0 0
    %240 = vmatprep.subr.bf16.mxu0 0
    %241 = vmatpush1.bf16.msra.mxu0 0
    %242 = vmatprep.mubr.bf16.mxu0 0
    %243 = vmatmul.mubr.bf16.gmra.mrb[0].mxu0 %v151
    %v244 = vpop.f32.mrb[0].mxu0
    %v245 = vadd.f32 %v104, %v244
    %v246 = vpop.f32.mrb[0].mxu0
    %v247 = vadd.f32 %v108, %v246
    %v248 = vpop.f32.mrb[0].mxu0
    %v249 = vpop.f32.mrb[0].mxu0
    %250 = vdwg.mxu0
    %vm251 = vcmp.gt.f32.partialorder %v204, 0.0
    %vm252 = vcmp.gt.f32.partialorder %v206, 0.0
    %vm253 = vcmp.gt.f32.partialorder %v245, 0.0
    %vm254 = vcmp.gt.f32.partialorder %v247, 0.0
    %v255 = vmul.f32 %v204, 0.2
    %v256 = vmul.f32 %v206, 0.2
    %v257 = vmul.f32 %v245, 0.2
    %v258 = vmul.f32 %v247, 0.2
    %v259 = vsel %vm251, %v204, %v255
    %v260 = vsel %vm252, %v206, %v256
    %v261 = vsel %vm253, %v245, %v257
    %v262 = vsel %vm254, %v247, %v258
    %v263 = vpack.c.bf16 %v259, %v259
    %v264 = vpack.c.bf16 %v260, %v260
    %v265 = vpack.c.bf16 %v261, %v261
    %v266 = vpack.c.bf16 %v262, %v262
    %v267 = vld [vmem:[#allocation7] sm:$0xff]
    %v268 = vld [vmem:[#allocation7 + $0x8] sm:$0xff]
    %v269 = vld [vmem:[#allocation7 + $0x10] sm:$0xff]
    %v270 = vld [vmem:[#allocation7 + $0x18] sm:$0xff]
    %v271 = vld [vmem:[#allocation7 + $0x20] sm:$0xff]
    %v272 = vld [vmem:[#allocation7 + $0x28] sm:$0xff]
    %v273 = vld [vmem:[#allocation7 + $0x30] sm:$0xff]
    %v274 = vld [vmem:[#allocation7 + $0x38] sm:$0xff]
    %v275 = vld [vmem:[#allocation7 + $0x40] sm:$0xff]
    %v276 = vld [vmem:[#allocation7 + $0x48] sm:$0xff]
    %v277 = vld [vmem:[#allocation7 + $0x50] sm:$0xff]
    %v278 = vld [vmem:[#allocation7 + $0x58] sm:$0xff]
    %v279 = vld [vmem:[#allocation7 + $0x60] sm:$0xff]
    %v280 = vld [vmem:[#allocation7 + $0x68] sm:$0xff]
    %v281 = vld [vmem:[#allocation7 + $0x70] sm:$0xff]
    %v282 = vld [vmem:[#allocation7 + $0x78] sm:$0xff]
    %v283 = vld [vmem:[#allocation7 + $0x80] sm:$0xff]
    %v284 = vld [vmem:[#allocation7 + $0x88] sm:$0xff]
    %v285 = vld [vmem:[#allocation7 + $0x90] sm:$0xff]
    %v286 = vld [vmem:[#allocation7 + $0x98] sm:$0xff]
    %v287 = vld [vmem:[#allocation7 + $0xa0] sm:$0xff]
    %v288 = vld [vmem:[#allocation7 + $0xa8] sm:$0xff]
    %v289 = vld [vmem:[#allocation7 + $0xb0] sm:$0xff]
    %v290 = vld [vmem:[#allocation7 + $0xb8] sm:$0xff]
    %v291 = vld [vmem:[#allocation7 + $0xc0] sm:$0xff]
    %v292 = vld [vmem:[#allocation7 + $0xc8] sm:$0xff]
    %v293 = vld [vmem:[#allocation7 + $0xd0] sm:$0xff]
    %v294 = vld [vmem:[#allocation7 + $0xd8] sm:$0xff]
    %v295 = vld [vmem:[#allocation7 + $0xe0] sm:$0xff]
    %v296 = vld [vmem:[#allocation7 + $0xe8] sm:$0xff]
    %v297 = vld [vmem:[#allocation7 + $0xf0] sm:$0xff]
    %v298 = vld [vmem:[#allocation7 + $0xf8] sm:$0xff]
    %v299 = vld [vmem:[#allocation7 + $0x100] sm:$0xff]
    %v300 = vld [vmem:[#allocation7 + $0x108] sm:$0xff]
    %v301 = vld [vmem:[#allocation7 + $0x110] sm:$0xff]
    %v302 = vld [vmem:[#allocation7 + $0x118] sm:$0xff]
    %v303 = vld [vmem:[#allocation7 + $0x120] sm:$0xff]
    %v304 = vld [vmem:[#allocation7 + $0x128] sm:$0xff]
    %v305 = vld [vmem:[#allocation7 + $0x130] sm:$0xff]
    %v306 = vld [vmem:[#allocation7 + $0x138] sm:$0xff]
    %v307 = vld [vmem:[#allocation7 + $0x140] sm:$0xff]
    %v308 = vld [vmem:[#allocation7 + $0x148] sm:$0xff]
    %v309 = vld [vmem:[#allocation7 + $0x150] sm:$0xff]
    %v310 = vld [vmem:[#allocation7 + $0x158] sm:$0xff]
    %v311 = vld [vmem:[#allocation7 + $0x160] sm:$0xff]
    %v312 = vld [vmem:[#allocation7 + $0x168] sm:$0xff]
    %v313 = vld [vmem:[#allocation7 + $0x170] sm:$0xff]
    %v314 = vld [vmem:[#allocation7 + $0x178] sm:$0xff]
    %v315 = vld [vmem:[#allocation7 + $0x180] sm:$0xff]
    %v316 = vld [vmem:[#allocation7 + $0x188] sm:$0xff]
    %v317 = vld [vmem:[#allocation7 + $0x190] sm:$0xff]
    %v318 = vld [vmem:[#allocation7 + $0x198] sm:$0xff]
    %v319 = vld [vmem:[#allocation7 + $0x1a0] sm:$0xff]
    %v320 = vld [vmem:[#allocation7 + $0x1a8] sm:$0xff]
    %v321 = vld [vmem:[#allocation7 + $0x1b0] sm:$0xff]
    %v322 = vld [vmem:[#allocation7 + $0x1b8] sm:$0xff]
    %v323 = vld [vmem:[#allocation7 + $0x1c0] sm:$0xff]
    %v324 = vld [vmem:[#allocation7 + $0x1c8] sm:$0xff]
    %v325 = vld [vmem:[#allocation7 + $0x1d0] sm:$0xff]
    %v326 = vld [vmem:[#allocation7 + $0x1d8] sm:$0xff]
    %v327 = vld [vmem:[#allocation7 + $0x1e0] sm:$0xff]
    %v328 = vld [vmem:[#allocation7 + $0x1e8] sm:$0xff]
    %v329 = vld [vmem:[#allocation7 + $0x1f0] sm:$0xff]
    %v330 = vld [vmem:[#allocation7 + $0x1f8] sm:$0xff]
    %v331 = vld [vmem:[#allocation7 + $0x200] sm:$0xff]
    %v332 = vld [vmem:[#allocation7 + $0x208] sm:$0xff]
    %v333 = vld [vmem:[#allocation7 + $0x210] sm:$0xff]
    %v334 = vld [vmem:[#allocation7 + $0x218] sm:$0xff]
    %v335 = vld [vmem:[#allocation7 + $0x220] sm:$0xff]
    %v336 = vld [vmem:[#allocation7 + $0x228] sm:$0xff]
    %v337 = vld [vmem:[#allocation7 + $0x230] sm:$0xff]
    %v338 = vld [vmem:[#allocation7 + $0x238] sm:$0xff]
    %v339 = vld [vmem:[#allocation7 + $0x240] sm:$0xff]
    %v340 = vld [vmem:[#allocation7 + $0x248] sm:$0xff]
    %v341 = vld [vmem:[#allocation7 + $0x250] sm:$0xff]
    %v342 = vld [vmem:[#allocation7 + $0x258] sm:$0xff]
    %v343 = vld [vmem:[#allocation7 + $0x260] sm:$0xff]
    %v344 = vld [vmem:[#allocation7 + $0x268] sm:$0xff]
    %v345 = vld [vmem:[#allocation7 + $0x270] sm:$0xff]
    %v346 = vld [vmem:[#allocation7 + $0x278] sm:$0xff]
    %v347 = vld [vmem:[#allocation7 + $0x280] sm:$0xff]
    %v348 = vld [vmem:[#allocation7 + $0x288] sm:$0xff]
    %v349 = vld [vmem:[#allocation7 + $0x290] sm:$0xff]
    %v350 = vld [vmem:[#allocation7 + $0x298] sm:$0xff]
    %v351 = vld [vmem:[#allocation7 + $0x2a0] sm:$0xff]
    %v352 = vld [vmem:[#allocation7 + $0x2a8] sm:$0xff]
    %v353 = vld [vmem:[#allocation7 + $0x2b0] sm:$0xff]
    %v354 = vld [vmem:[#allocation7 + $0x2b8] sm:$0xff]
    %v355 = vld [vmem:[#allocation7 + $0x2c0] sm:$0xff]
    %v356 = vld [vmem:[#allocation7 + $0x2c8] sm:$0xff]
    %v357 = vld [vmem:[#allocation7 + $0x2d0] sm:$0xff]
    %v358 = vld [vmem:[#allocation7 + $0x2d8] sm:$0xff]
    %v359 = vld [vmem:[#allocation7 + $0x2e0] sm:$0xff]
    %v360 = vld [vmem:[#allocation7 + $0x2e8] sm:$0xff]
    %v361 = vld [vmem:[#allocation7 + $0x2f0] sm:$0xff]
    %v362 = vld [vmem:[#allocation7 + $0x2f8] sm:$0xff]
    %v363 = vld [vmem:[#allocation7 + $0x300] sm:$0xff]
    %v364 = vld [vmem:[#allocation7 + $0x308] sm:$0xff]
    %v365 = vld [vmem:[#allocation7 + $0x310] sm:$0xff]
    %v366 = vld [vmem:[#allocation7 + $0x318] sm:$0xff]
    %v367 = vld [vmem:[#allocation7 + $0x320] sm:$0xff]
    %v368 = vld [vmem:[#allocation7 + $0x328] sm:$0xff]
    %v369 = vld [vmem:[#allocation7 + $0x330] sm:$0xff]
    %v370 = vld [vmem:[#allocation7 + $0x338] sm:$0xff]
    %v371 = vld [vmem:[#allocation7 + $0x340] sm:$0xff]
    %v372 = vld [vmem:[#allocation7 + $0x348] sm:$0xff]
    %v373 = vld [vmem:[#allocation7 + $0x350] sm:$0xff]
    %v374 = vld [vmem:[#allocation7 + $0x358] sm:$0xff]
    %v375 = vld [vmem:[#allocation7 + $0x360] sm:$0xff]
    %v376 = vld [vmem:[#allocation7 + $0x368] sm:$0xff]
    %v377 = vld [vmem:[#allocation7 + $0x370] sm:$0xff]
    %v378 = vld [vmem:[#allocation7 + $0x378] sm:$0xff]
    %v379 = vld [vmem:[#allocation7 + $0x380] sm:$0xff]
    %v380 = vld [vmem:[#allocation7 + $0x388] sm:$0xff]
    %v381 = vld [vmem:[#allocation7 + $0x390] sm:$0xff]
    %v382 = vld [vmem:[#allocation7 + $0x398] sm:$0xff]
    %v383 = vld [vmem:[#allocation7 + $0x3a0] sm:$0xff]
    %v384 = vld [vmem:[#allocation7 + $0x3a8] sm:$0xff]
    %v385 = vld [vmem:[#allocation7 + $0x3b0] sm:$0xff]
    %v386 = vld [vmem:[#allocation7 + $0x3b8] sm:$0xff]
    %v387 = vld [vmem:[#allocation7 + $0x3c0] sm:$0xff]
    %v388 = vld [vmem:[#allocation7 + $0x3c8] sm:$0xff]
    %v389 = vld [vmem:[#allocation7 + $0x3d0] sm:$0xff]
    %v390 = vld [vmem:[#allocation7 + $0x3d8] sm:$0xff]
    %v391 = vld [vmem:[#allocation7 + $0x3e0] sm:$0xff]
    %v392 = vld [vmem:[#allocation7 + $0x3e8] sm:$0xff]
    %v393 = vld [vmem:[#allocation7 + $0x3f0] sm:$0xff]
    %v394 = vld [vmem:[#allocation7 + $0x3f8] sm:$0xff]
    %v395 = vld [vmem:[%s4] sm:$0x3]
    %v397 = vlaneseq
    %v398 = vshrl.u32 %v397, 7
    %v399 = vsub.s32 0, %v398
    %v400 = vrot.slane %v395, %v399
    %v401 = vlaneseq
    %v402 = vshrl.u32 %v401, 7
    %v403 = vsub.s32 1, %v402
    %v404 = vrot.slane %v395, %v403
    %407 = vmatprep.subr.mxu0 %v268
    %408 = vmatpush1.msra.mxu0 %v267
    %409 = vmatprep.subr.mxu0 %v270
    %410 = vmatpush1.msra.mxu0 %v269
    %411 = vmatprep.subr.mxu0 %v272
    %412 = vmatpush1.msra.mxu0 %v271
    %413 = vmatprep.subr.mxu0 %v274
    %414 = vmatpush1.msra.mxu0 %v273
    %415 = vmatprep.subr.mxu0 %v276
    %416 = vmatpush1.msra.mxu0 %v275
    %417 = vmatprep.subr.mxu0 %v278
    %418 = vmatpush1.msra.mxu0 %v277
    %419 = vmatprep.subr.mxu0 %v280
    %420 = vmatpush1.msra.mxu0 %v279
    %421 = vmatprep.subr.mxu0 %v282
    %422 = vmatpush1.msra.mxu0 %v281
    %423 = vmatprep.subr.mxu0 %v284
    %424 = vmatpush1.msra.mxu0 %v283
    %425 = vmatprep.subr.mxu0 %v286
    %426 = vmatpush1.msra.mxu0 %v285
    %427 = vmatprep.subr.mxu0 %v288
    %428 = vmatpush1.msra.mxu0 %v287
    %429 = vmatprep.subr.mxu0 %v290
    %430 = vmatpush1.msra.mxu0 %v289
    %431 = vmatprep.subr.mxu0 %v292
    %432 = vmatpush1.msra.mxu0 %v291
    %433 = vmatprep.subr.mxu0 %v294
    %434 = vmatpush1.msra.mxu0 %v293
    %435 = vmatprep.subr.mxu0 %v296
    %436 = vmatpush1.msra.mxu0 %v295
    %437 = vmatprep.subr.mxu0 %v298
    %438 = vmatpush1.msra.mxu0 %v297
    %439 = vmatprep.subr.mxu0 %v300
    %440 = vmatpush1.msra.mxu0 %v299
    %441 = vmatprep.subr.mxu0 %v302
    %442 = vmatpush1.msra.mxu0 %v301
    %443 = vmatprep.subr.mxu0 %v304
    %444 = vmatpush1.msra.mxu0 %v303
    %445 = vmatprep.subr.mxu0 %v306
    %446 = vmatpush1.msra.mxu0 %v305
    %447 = vmatprep.subr.mxu0 %v308
    %448 = vmatpush1.msra.mxu0 %v307
    %449 = vmatprep.subr.mxu0 %v310
    %450 = vmatpush1.msra.mxu0 %v309
    %451 = vmatprep.subr.mxu0 %v312
    %452 = vmatpush1.msra.mxu0 %v311
    %453 = vmatprep.subr.mxu0 %v314
    %454 = vmatpush1.msra.mxu0 %v313
    %455 = vmatprep.subr.mxu0 %v316
    %456 = vmatpush1.msra.mxu0 %v315
    %457 = vmatprep.subr.mxu0 %v318
    %458 = vmatpush1.msra.mxu0 %v317
    %459 = vmatprep.subr.mxu0 %v320
    %460 = vmatpush1.msra.mxu0 %v319
    %461 = vmatprep.subr.mxu0 %v322
    %462 = vmatpush1.msra.mxu0 %v321
    %463 = vmatprep.subr.mxu0 %v324
    %464 = vmatpush1.msra.mxu0 %v323
    %465 = vmatprep.subr.mxu0 %v326
    %466 = vmatpush1.msra.mxu0 %v325
    %467 = vmatprep.subr.mxu0 %v328
    %468 = vmatpush1.msra.mxu0 %v327
    %469 = vmatprep.subr.mxu0 %v330
    %470 = vmatpush1.msra.mxu0 %v329
    %471 = vmatprep.mubr.bf16.mxu0 %v264
    %472 = vmatmul.mubr.bf16.gmra.mrb[0].mxu0 %v263
    %v473 = vpop.f32.mrb[0].mxu0
    %v474 = vadd.f32 %v400, %v473
    %v475 = vpop.f32.mrb[0].mxu0
    %v476 = vadd.f32 %v404, %v475
    %v477 = vpop.f32.mrb[0].mxu0
    %v478 = vpop.f32.mrb[0].mxu0
    %479 = vdwg.mxu0
    %480 = vmatprep.subr.mxu0 %v332
    %481 = vmatpush1.msra.mxu0 %v331
    %482 = vmatprep.subr.mxu0 %v334
    %483 = vmatpush1.msra.mxu0 %v333
    %484 = vmatprep.subr.mxu0 %v336
    %485 = vmatpush1.msra.mxu0 %v335
    %486 = vmatprep.subr.mxu0 %v338
    %487 = vmatpush1.msra.mxu0 %v337
    %488 = vmatprep.subr.mxu0 %v340
    %489 = vmatpush1.msra.mxu0 %v339
    %490 = vmatprep.subr.mxu0 %v342
    %491 = vmatpush1.msra.mxu0 %v341
    %492 = vmatprep.subr.mxu0 %v344
    %493 = vmatpush1.msra.mxu0 %v343
    %494 = vmatprep.subr.mxu0 %v346
    %495 = vmatpush1.msra.mxu0 %v345
    %496 = vmatprep.subr.mxu0 %v348
    %497 = vmatpush1.msra.mxu0 %v347
    %498 = vmatprep.subr.mxu0 %v350
    %499 = vmatpush1.msra.mxu0 %v349
    %500 = vmatprep.subr.mxu0 %v352
    %501 = vmatpush1.msra.mxu0 %v351
    %502 = vmatprep.subr.mxu0 %v354
    %503 = vmatpush1.msra.mxu0 %v353
    %504 = vmatprep.subr.mxu0 %v356
    %505 = vmatpush1.msra.mxu0 %v355
    %506 = vmatprep.subr.mxu0 %v358
    %507 = vmatpush1.msra.mxu0 %v357
    %508 = vmatprep.subr.mxu0 %v360
    %509 = vmatpush1.msra.mxu0 %v359
    %510 = vmatprep.subr.mxu0 %v362
    %511 = vmatpush1.msra.mxu0 %v361
    %512 = vmatprep.subr.mxu0 %v364
    %513 = vmatpush1.msra.mxu0 %v363
    %514 = vmatprep.subr.mxu0 %v366
    %515 = vmatpush1.msra.mxu0 %v365
    %516 = vmatprep.subr.mxu0 %v368
    %517 = vmatpush1.msra.mxu0 %v367
    %518 = vmatprep.subr.mxu0 %v370
    %519 = vmatpush1.msra.mxu0 %v369
    %520 = vmatprep.subr.mxu0 %v372
    %521 = vmatpush1.msra.mxu0 %v371
    %522 = vmatprep.subr.mxu0 %v374
    %523 = vmatpush1.msra.mxu0 %v373
    %524 = vmatprep.subr.mxu0 %v376
    %525 = vmatpush1.msra.mxu0 %v375
    %526 = vmatprep.subr.mxu0 %v378
    %527 = vmatpush1.msra.mxu0 %v377
    %528 = vmatprep.subr.mxu0 %v380
    %529 = vmatpush1.msra.mxu0 %v379
    %530 = vmatprep.subr.mxu0 %v382
    %531 = vmatpush1.msra.mxu0 %v381
    %532 = vmatprep.subr.mxu0 %v384
    %533 = vmatpush1.msra.mxu0 %v383
    %534 = vmatprep.subr.mxu0 %v386
    %535 = vmatpush1.msra.mxu0 %v385
    %536 = vmatprep.subr.mxu0 %v388
    %537 = vmatpush1.msra.mxu0 %v387
    %538 = vmatprep.subr.mxu0 %v390
    %539 = vmatpush1.msra.mxu0 %v389
    %540 = vmatprep.subr.mxu0 %v392
    %541 = vmatpush1.msra.mxu0 %v391
    %542 = vmatprep.subr.mxu0 %v394
    %543 = vmatpush1.msra.mxu0 %v393
    %544 = vmatprep.mubr.bf16.mxu0 %v266
    %545 = vmatmul.mubr.bf16.gmra.mrb[0].mxu0 %v265
    %v546 = vpop.f32.mrb[0].mxu0
    %v547 = vadd.f32 %v474, %v546
    %v548 = vpop.f32.mrb[0].mxu0
    %v549 = vadd.f32 %v476, %v548
    %v550 = vpop.f32.mrb[0].mxu0
    %v551 = vpop.f32.mrb[0].mxu0
    %552 = vdwg.mxu0
    %vm553 = vcmp.gt.f32.partialorder %v547, 0.0
    %vm554 = vcmp.gt.f32.partialorder %v549, 0.0
    %v555 = vmul.f32 %v547, 0.2
    %v556 = vmul.f32 %v549, 0.2
    %v557 = vsel %vm553, %v547, %v555
    %v558 = vsel %vm554, %v549, %v556
    %v559 = vpack.c.bf16 %v557, %v557
    %v560 = vpack.c.bf16 %v558, %v558
    %v561 = vld [vmem:[#allocation8] sm:$0xf]
    %v562 = vld [vmem:[#allocation8 + $0x4] sm:$0xf]
    %v563 = vld [vmem:[#allocation8 + $0x8] sm:$0xf]
    %v564 = vld [vmem:[#allocation8 + $0xc] sm:$0xf]
    %v565 = vld [vmem:[#allocation8 + $0x10] sm:$0xf]
    %v566 = vld [vmem:[#allocation8 + $0x14] sm:$0xf]
    %v567 = vld [vmem:[#allocation8 + $0x18] sm:$0xf]
    %v568 = vld [vmem:[#allocation8 + $0x1c] sm:$0xf]
    %v569 = vld [vmem:[#allocation8 + $0x20] sm:$0xf]
    %v570 = vld [vmem:[#allocation8 + $0x24] sm:$0xf]
    %v571 = vld [vmem:[#allocation8 + $0x28] sm:$0xf]
    %v572 = vld [vmem:[#allocation8 + $0x2c] sm:$0xf]
    %v573 = vld [vmem:[#allocation8 + $0x30] sm:$0xf]
    %v574 = vld [vmem:[#allocation8 + $0x34] sm:$0xf]
    %v575 = vld [vmem:[#allocation8 + $0x38] sm:$0xf]
    %v576 = vld [vmem:[#allocation8 + $0x3c] sm:$0xf]
    %v577 = vld [vmem:[#allocation8 + $0x40] sm:$0xf]
    %v578 = vld [vmem:[#allocation8 + $0x44] sm:$0xf]
    %v579 = vld [vmem:[#allocation8 + $0x48] sm:$0xf]
    %v580 = vld [vmem:[#allocation8 + $0x4c] sm:$0xf]
    %v581 = vld [vmem:[#allocation8 + $0x50] sm:$0xf]
    %v582 = vld [vmem:[#allocation8 + $0x54] sm:$0xf]
    %v583 = vld [vmem:[#allocation8 + $0x58] sm:$0xf]
    %v584 = vld [vmem:[#allocation8 + $0x5c] sm:$0xf]
    %v585 = vld [vmem:[#allocation8 + $0x60] sm:$0xf]
    %v586 = vld [vmem:[#allocation8 + $0x64] sm:$0xf]
    %v587 = vld [vmem:[#allocation8 + $0x68] sm:$0xf]
    %v588 = vld [vmem:[#allocation8 + $0x6c] sm:$0xf]
    %v589 = vld [vmem:[#allocation8 + $0x70] sm:$0xf]
    %v590 = vld [vmem:[#allocation8 + $0x74] sm:$0xf]
    %v591 = vld [vmem:[#allocation8 + $0x78] sm:$0xf]
    %v592 = vld [vmem:[#allocation8 + $0x7c] sm:$0xf]
    %v593 = vld [vmem:[%s6] sm:$0x1]
    %v595 = vlaneseq
    %v596 = vshrl.u32 %v595, 7
    %v597 = vsub.s32 0, %v596
    %v598 = vrot.slane %v593, %v597
    %v632 = vunpack.c.l.b16 %v561
    %v633 = vunpack.c.l.b16 %v562
    %v634 = vunpack.c.l.b16 %v563
    %v635 = vunpack.c.l.b16 %v564
    %v636 = vunpack.c.l.b16 %v565
    %v637 = vunpack.c.l.b16 %v566
    %v638 = vunpack.c.l.b16 %v567
    %v639 = vunpack.c.l.b16 %v568
    %v640 = vunpack.c.l.b16 %v569
    %v641 = vunpack.c.l.b16 %v570
    %v642 = vunpack.c.l.b16 %v571
    %v643 = vunpack.c.l.b16 %v572
    %v644 = vunpack.c.l.b16 %v573
    %v645 = vunpack.c.l.b16 %v574
    %v646 = vunpack.c.l.b16 %v575
    %v647 = vunpack.c.l.b16 %v576
    %v648 = vunpack.c.l.b16 %v577
    %v649 = vunpack.c.l.b16 %v578
    %v650 = vunpack.c.l.b16 %v579
    %v651 = vunpack.c.l.b16 %v580
    %v652 = vunpack.c.l.b16 %v581
    %v653 = vunpack.c.l.b16 %v582
    %v654 = vunpack.c.l.b16 %v583
    %v655 = vunpack.c.l.b16 %v584
    %v656 = vunpack.c.l.b16 %v585
    %v657 = vunpack.c.l.b16 %v586
    %v658 = vunpack.c.l.b16 %v587
    %v659 = vunpack.c.l.b16 %v588
    %v660 = vunpack.c.l.b16 %v589
    %v661 = vunpack.c.l.b16 %v590
    %v662 = vunpack.c.l.b16 %v591
    %v663 = vunpack.c.l.b16 %v592
    %v664 = vpack.c.b16 %v633, %v632
    %v665 = vpack.c.b16 %v635, %v634
    %v666 = vpack.c.b16 %v637, %v636
    %v667 = vpack.c.b16 %v639, %v638
    %v668 = vpack.c.b16 %v641, %v640
    %v669 = vpack.c.b16 %v643, %v642
    %v670 = vpack.c.b16 %v645, %v644
    %v671 = vpack.c.b16 %v647, %v646
    %v672 = vpack.c.b16 %v649, %v648
    %v673 = vpack.c.b16 %v651, %v650
    %v674 = vpack.c.b16 %v653, %v652
    %v675 = vpack.c.b16 %v655, %v654
    %v676 = vpack.c.b16 %v657, %v656
    %v677 = vpack.c.b16 %v659, %v658
    %v678 = vpack.c.b16 %v661, %v660
    %v679 = vpack.c.b16 %v663, %v662
    %696 = vmatprep.subr.bf16.mxu0 0
    %697 = vmatpush1.bf16.msra.mxu0 %v664
    %698 = vmatprep.subr.bf16.mxu0 0
    %699 = vmatpush1.bf16.msra.mxu0 %v665
    %700 = vmatprep.subr.bf16.mxu0 0
    %701 = vmatpush1.bf16.msra.mxu0 %v666
    %702 = vmatprep.subr.bf16.mxu0 0
    %703 = vmatpush1.bf16.msra.mxu0 %v667
    %704 = vmatprep.subr.bf16.mxu0 0
    %705 = vmatpush1.bf16.msra.mxu0 %v668
    %706 = vmatprep.subr.bf16.mxu0 0
    %707 = vmatpush1.bf16.msra.mxu0 %v669
    %708 = vmatprep.subr.bf16.mxu0 0
    %709 = vmatpush1.bf16.msra.mxu0 %v670
    %710 = vmatprep.subr.bf16.mxu0 0
    %711 = vmatpush1.bf16.msra.mxu0 %v671
    %712 = vmatprep.subr.bf16.mxu0 0
    %713 = vmatpush1.bf16.msra.mxu0 %v672
    %714 = vmatprep.subr.bf16.mxu0 0
    %715 = vmatpush1.bf16.msra.mxu0 %v673
    %716 = vmatprep.subr.bf16.mxu0 0
    %717 = vmatpush1.bf16.msra.mxu0 %v674
    %718 = vmatprep.subr.bf16.mxu0 0
    %719 = vmatpush1.bf16.msra.mxu0 %v675
    %720 = vmatprep.subr.bf16.mxu0 0
    %721 = vmatpush1.bf16.msra.mxu0 %v676
    %722 = vmatprep.subr.bf16.mxu0 0
    %723 = vmatpush1.bf16.msra.mxu0 %v677
    %724 = vmatprep.subr.bf16.mxu0 0
    %725 = vmatpush1.bf16.msra.mxu0 %v678
    %726 = vmatprep.subr.bf16.mxu0 0
    %727 = vmatpush1.bf16.msra.mxu0 %v679
    %728 = vmatprep.mubr.bf16.mxu0 %v560
    %729 = vmatmul.mubr.bf16.gmra.mrb[0].mxu0 %v559
    %v730 = vpop.f32.mrb[0].mxu0
    %v731 = vadd.f32 %v598, %v730
    %v732 = vpop.f32.mrb[0].mxu0
    %v733 = vpop.f32.mrb[0].mxu0
    %v734 = vpop.f32.mrb[0].mxu0
    %735 = vdwg.mxu0
    %vm736 = vcmp.gt.f32.partialorder %v731, 0.0
    %v737 = vmul.f32 %v731, 0.2
    %v738 = vsel %vm736, %v731, %v737
    %739 = vst [vmem:[#allocation10] sm:$0xff] %v738
    // Predicated region
    $region46: #{tpu_custom_call.1} parent=1 // pred_check
      _
    $region47: #{tpu_custom_call.1} parent=1 // pred_check_branch
      %741 = sbr.rel (0) target = $region49
    $region48: #{tpu_custom_call.1} parent=1 // pred_region
      %s743 = ssub.s32 128, 128
      %744 = vsyncadd [#allocation4], %s743
      %s746 = sshll.u32 [#allocation10], 4
      %s747 = int_to_ptr.vmem [resolvable:$true] %s746
      %749 = dma.vmem_to_hbm [thread:$0]  %s747, 128, %s7, [#allocation4]
    $region49: #{tpu_custom_call.1} parent=1 // pred_fallthru
      _
    // Predicated region
    $region50: #{tpu_custom_call.1} parent=1 // pred_check
      _
    $region51: #{tpu_custom_call.1} parent=1 // pred_check_branch
      %751 = sbr.rel (0) target = $region53
    $region52: #{tpu_custom_call.1} parent=1 // pred_region
      %752 = dma.done [#allocation4], 128
    $region53: #{tpu_custom_call.1} parent=1 // pred_fallthru
      _
    %753 = vsyncpa [#allocation3], 1
    %754 = vsyncpa [#allocation6], 1
    %755 = vsyncpa [#allocation9], 1
    %756 = vsyncpa [#allocation4], 1

</llo_original>
